<compile_context>
chip_gen: v5e
topology: v5e:2x2
jax: 0.10.0
libtpu: 0.0.40
codegen_flags: <defaults>
</compile_context>

<pallas_src>
import functools

import jax
import jax.numpy as jnp
from jax.experimental import pallas as pl
from jax.experimental.pallas import tpu as pltpu


def _dice_loss_kernel(weight_ref, tgt_ref, score_ref, loss_ref, dice_ref,
                      inter_ref, zsum_ref, ysum_ref,
                      *, n_classes, apply_softmax, mask_tail):
    """One (batch, pixel-tile) grid step of the weighted multi-class dice loss.

    weight_ref : SMEM (C,)             f32  per-class weights
    tgt_ref    : VMEM (1, TR, 128)     i32  class labels (padding = -1)
    score_ref  : VMEM (1, C, TR, 128)  f32  per-class scores (padding = 0)
    loss_ref   : SMEM (1,)             f32  output: sum_i dice_i * w_i / C
    dice_ref   : SMEM (C,)             f32  output: class-wise dice (1 - loss_i)
    inter_ref  : VMEM (C, 128)         f32  running per-class sum(score * onehot)
    zsum_ref   : VMEM (C, 128)         f32  running per-class sum(score * score)
    ysum_ref   : VMEM (C, 128)         f32  running per-class sum(onehot)
    """
    num_r = pl.num_programs(1)
    step = pl.program_id(0) * num_r + pl.program_id(1)
    num_steps = pl.num_programs(0) * num_r

    @pl.when(step == 0)
    def _init():
        inter_ref[...] = jnp.zeros_like(inter_ref)
        zsum_ref[...] = jnp.zeros_like(zsum_ref)
        ysum_ref[...] = jnp.zeros_like(ysum_ref)

    tgt = tgt_ref[0]                                    # (TR, 128) int32

    if apply_softmax:
        # Fused channel softmax: all C channels of this pixel tile are resident.
        chans = [score_ref[0, i] for i in range(n_classes)]
        m = chans[0]
        for c in chans[1:]:
            m = jnp.maximum(m, c)
        exps = [jnp.exp(c - m) for c in chans]          # EUP
        denom = exps[0]
        for e in exps[1:]:
            denom = denom + e
        inv = 1.0 / denom
        chans = [e * inv for e in exps]
        if mask_tail:
            # Padded pixels (label == -1) must not contribute to z_sum.
            valid = tgt >= 0
            chans = [jnp.where(valid, c, 0.0) for c in chans]
        get_score = lambda i: chans[i]
    else:
        get_score = lambda i: score_ref[0, i]

    # Per-class partial sums: reduce over sublanes only; the cross-lane (XLU)
    # reduce is deferred to the single finalize step.
    for i in range(n_classes):
        s = get_score(i)                                # (TR, 128) f32
        t = (tgt == i).astype(jnp.float32)              # one-hot slice, in-kernel
        inter_ref[i:i + 1, :] = inter_ref[i:i + 1, :] + jnp.sum(
            s * t, axis=0, keepdims=True)
        zsum_ref[i:i + 1, :] = zsum_ref[i:i + 1, :] + jnp.sum(
            s * s, axis=0, keepdims=True)
        ysum_ref[i:i + 1, :] = ysum_ref[i:i + 1, :] + jnp.sum(
            t, axis=0, keepdims=True)                   # t*t == t for one-hot

    @pl.when(step == num_steps - 1)
    def _finalize():
        smooth = 1e-5
        total = 0.0
        for i in range(n_classes):
            intersect = jnp.sum(inter_ref[i:i + 1, :])
            z_sum = jnp.sum(zsum_ref[i:i + 1, :])
            y_sum = jnp.sum(ysum_ref[i:i + 1, :])
            coeff = (2.0 * intersect + smooth) / (z_sum + y_sum + smooth)
            dice_ref[i] = coeff                         # class_wise_dice entry
            total = total + (1.0 - coeff) * weight_ref[i]
        loss_ref[0] = total / n_classes


def _choose_pixel_tiling(R, budget_rows):
    """Pick TR (sublane rows of 128 lanes per grid step) and padded row count.

    TR must divide the (possibly padded) row count and be a multiple of 8 or
    equal to the full extent (Mosaic (8,128) block constraint).
    """
    if R <= budget_rows:
        return R, R                      # one block per batch along pixel axis
    t = (budget_rows // 8) * 8
    while t >= 8:
        if R % t == 0:
            return t, R                  # clean divisor -> no padding copy
        t -= 8
    # Rare fallback: no multiple-of-8 divisor fits -> pad rows up (one copy).
    tr = max(8, (budget_rows // 8) * 8)
    return tr, ((R + tr - 1) // tr) * tr


def dice_loss(inputs, target, n_classes, weight=None, softmax=False):
    """JAX/Pallas equivalent of DiceLoss.forward.

    inputs : (N, C, H, W) float  per-class scores (probabilities unless softmax=True)
    target : (N, H, W)    int    class labels in [0, n_classes)
    Returns (loss_scalar, class_wise_dice[C]).
    """
    N, C, H, W = inputs.shape
    assert C == n_classes
    assert target.shape == (N, H, W)

    if weight is None:
        weight = [1.0] * n_classes
    weight = jnp.asarray(weight, dtype=jnp.float32)

    # Keep the natural NCHW layout: only free reshapes when H*W % 128 == 0.
    HW = H * W
    HW_pad = ((HW + 127) // 128) * 128
    score = inputs.reshape(N, C, HW)
    tgt = target.reshape(N, HW).astype(jnp.int32)
    padded = HW_pad != HW
    if padded:
        # Tail fallback for odd spatial sizes (score pad = 0, label pad = -1).
        score = jnp.pad(score, ((0, 0), (0, 0), (0, HW_pad - HW)))
        tgt = jnp.pad(tgt, ((0, 0), (0, HW_pad - HW)), constant_values=-1)
    R = HW_pad // 128
    score = score.reshape(N, C, R, 128)
    tgt = tgt.reshape(N, R, 128)
    if score.dtype != jnp.float32:
        score = score.astype(jnp.float32)

    # TR budget: double-buffered (1,C,TR,128) f32 score + (1,TR,128) i32 target
    # kept well inside the default scoped VMEM on v5e (16 MiB) / v6e / v7x (32 MiB).
    budget_bytes = 6 * 1024 * 1024
    per_row_bytes = 2 * (n_classes + 1) * 128 * 4
    TR, R_pad = _choose_pixel_tiling(R, max(8, budget_bytes // per_row_bytes))
    if R_pad != R:
        score = jnp.pad(score, ((0, 0), (0, 0), (0, R_pad - R), (0, 0)))
        tgt = jnp.pad(tgt, ((0, 0), (0, R_pad - R), (0, 0)), constant_values=-1)
        R = R_pad
        padded = True

    grid = (N, R // TR)

    kernel = functools.partial(
        _dice_loss_kernel,
        n_classes=n_classes,
        apply_softmax=bool(softmax),
        mask_tail=bool(softmax) and padded,
    )

    n_pix = N * R * 128
    cost = pl.CostEstimate(
        flops=int(6 * n_classes * n_pix),
        transcendentals=int(n_classes * n_pix) if softmax else 0,
        bytes_accessed=int(4 * (n_classes + 1) * n_pix),
    )

    loss, class_dice = pl.pallas_call(
        kernel,
        out_shape=(
            jax.ShapeDtypeStruct((1,), jnp.float32),
            jax.ShapeDtypeStruct((n_classes,), jnp.float32),
        ),
        grid_spec=pltpu.PrefetchScalarGridSpec(
            num_scalar_prefetch=0,
            grid=grid,
            in_specs=[
                pl.BlockSpec(memory_space=pltpu.MemorySpace.SMEM),         # weight
                pl.BlockSpec((1, TR, 128), lambda n, r: (n, r, 0)),        # labels
                pl.BlockSpec((1, C, TR, 128), lambda n, r: (n, 0, r, 0)),  # scores
            ],
            out_specs=(
                pl.BlockSpec(memory_space=pltpu.MemorySpace.SMEM),         # loss
                pl.BlockSpec(memory_space=pltpu.MemorySpace.SMEM),         # class dice
            ),
            scratch_shapes=[
                pltpu.VMEM((n_classes, 128), jnp.float32),   # intersect partials
                pltpu.VMEM((n_classes, 128), jnp.float32),   # z_sum partials
                pltpu.VMEM((n_classes, 128), jnp.float32),   # y_sum partials
            ],
        ),
        compiler_params=pltpu.CompilerParams(
            dimension_semantics=("arbitrary", "arbitrary"),
        ),
        cost_estimate=cost,
    )(weight, tgt, score)

    return loss[0], class_dice


def _reference_dice_loss(inputs, target, n_classes, weight=None, softmax=False):
    """Pure-JAX reference mirroring the PyTorch module, for verification."""
    if softmax:
        inputs = jax.nn.softmax(inputs, axis=1)
    onehot = (target[:, None, :, :] == jnp.arange(n_classes)[None, :, None, None]
              ).astype(jnp.float32)
    if weight is None:
        weight = [1.0] * n_classes
    smooth = 1e-5
    loss = 0.0
    for i in range(n_classes):
        s = inputs[:, i]
        t = onehot[:, i]
        intersect = jnp.sum(s * t)
        y_sum = jnp.sum(t * t)
        z_sum = jnp.sum(s * s)
        d = 1.0 - (2.0 * intersect + smooth) / (z_sum + y_sum + smooth)
        loss = loss + d * weight[i]
    return loss / n_classes


if __name__ == "__main__":
    n_classes = 4
    N, H, W = 2, 16, 16

    key = jax.random.PRNGKey(0)
    k1, k2 = jax.random.split(key)

    # Deterministic synthetic inputs: probabilities over channels + int labels.
    logits = jax.random.normal(k1, (N, n_classes, H, W), dtype=jnp.float32)
    probs = jax.nn.softmax(logits, axis=1)              # already-normalized scores
    target = jax.random.randint(k2, (N, H, W), 0, n_classes, dtype=jnp.int32)

    # Path 1: pre-normalized scores (softmax=False), as in the previous version.
    loss, class_dice = dice_loss(probs, target, n_classes, weight=None,
                                 softmax=False)
    loss = jax.block_until_ready(loss)
    class_dice = jax.block_until_ready(class_dice)
    ref = _reference_dice_loss(probs, target, n_classes)
    assert jnp.allclose(loss, ref, atol=1e-5, rtol=1e-5), (loss, ref)

    # Path 2: raw logits with the channel softmax fused into the kernel.
    loss_sm, _ = dice_loss(logits, target, n_classes, weight=None, softmax=True)
    loss_sm = jax.block_until_ready(loss_sm)
    ref_sm = _reference_dice_loss(logits, target, n_classes, softmax=True)
    assert jnp.allclose(loss_sm, ref_sm, atol=1e-4, rtol=1e-4), (loss_sm, ref_sm)

    print("KERNEL_OK")
</pallas_src>

<mosaic_0001>
module attributes {stable_mosaic.version = 11 : i64} {
  func.func @_dice_loss_kernel(%arg0: i32, %arg1: i32, %arg2: memref<4xf32, #tpu.memory_space<smem>>, %arg3: memref<1x2x128xi32, #tpu.memory_space<vmem>>, %arg4: memref<1x4x2x128xf32, #tpu.memory_space<vmem>>, %arg5: memref<1xf32, #tpu.memory_space<smem>>, %arg6: memref<4xf32, #tpu.memory_space<smem>>, %arg7: memref<4x128xf32, #tpu.memory_space<vmem>>, %arg8: memref<4x128xf32, #tpu.memory_space<vmem>>, %arg9: memref<4x128xf32, #tpu.memory_space<vmem>>) attributes {dimension_semantics = [#tpu.dimension_semantics<arbitrary>, #tpu.dimension_semantics<arbitrary>], iteration_bounds = array<i64: 2, 1>, scalar_prefetch = 0 : i64, scratch_operands = 3 : i64, tpu.core_type = #tpu.core_type<tc>, window_params = [{transform_indices = @transform_0, window_bounds = array<i64: 4>}, {transform_indices = @transform_1, window_bounds = array<i64: 1, 2, 128>}, {transform_indices = @transform_2, window_bounds = array<i64: 1, 4, 2, 128>}, {transform_indices = @transform_3, window_bounds = array<i64: 1>}, {transform_indices = @transform_4, window_bounds = array<i64: 4>}]} {
    %c1_i32 = arith.constant 1 : i32
    %0 = arith.muli %arg0, %c1_i32 : i32
    %1 = arith.addi %0, %arg1 : i32
    %c0_i32 = arith.constant 0 : i32
    %2 = arith.cmpi eq, %1, %c0_i32 : i32
    %3 = arith.extui %2 : i1 to i32
    %c0_i32_0 = arith.constant 0 : i32
    %4 = arith.cmpi ne, %3, %c0_i32_0 : i32
    scf.if %4 {
      %cst_79 = arith.constant 0.000000e+00 : f32
      %102 = vector.broadcast %cst_79 : f32 to vector<4x128xf32>
      %c0_80 = arith.constant 0 : index
      %c0_81 = arith.constant 0 : index
      %103 = vector.load %arg7[%c0_80, %c0_81] : memref<4x128xf32, #tpu.memory_space<vmem>>, vector<4x128xf32>
      tpu.vector_store %arg7[%c0_80, %c0_81], %102 {strides = array<i32>} : memref<4x128xf32, #tpu.memory_space<vmem>>, vector<4x128xf32>,
      %cst_82 = arith.constant 0.000000e+00 : f32
      %104 = vector.broadcast %cst_82 : f32 to vector<4x128xf32>
      %c0_83 = arith.constant 0 : index
      %c0_84 = arith.constant 0 : index
      %105 = vector.load %arg8[%c0_83, %c0_84] : memref<4x128xf32, #tpu.memory_space<vmem>>, vector<4x128xf32>
      tpu.vector_store %arg8[%c0_83, %c0_84], %104 {strides = array<i32>} : memref<4x128xf32, #tpu.memory_space<vmem>>, vector<4x128xf32>,
      %cst_85 = arith.constant 0.000000e+00 : f32
      %106 = vector.broadcast %cst_85 : f32 to vector<4x128xf32>
      %c0_86 = arith.constant 0 : index
      %c0_87 = arith.constant 0 : index
      %107 = vector.load %arg9[%c0_86, %c0_87] : memref<4x128xf32, #tpu.memory_space<vmem>>, vector<4x128xf32>
      tpu.vector_store %arg9[%c0_86, %c0_87], %106 {strides = array<i32>} : memref<4x128xf32, #tpu.memory_space<vmem>>, vector<4x128xf32>,
    } else {
    }
    %c0 = arith.constant 0 : index
    %c0_1 = arith.constant 0 : index
    %c0_2 = arith.constant 0 : index
    %5 = vector.load %arg3[%c0, %c0_1, %c0_2] : memref<1x2x128xi32, #tpu.memory_space<vmem>>, vector<1x2x128xi32>
    %6 = vector.shape_cast %5 : vector<1x2x128xi32> to vector<2x128xi32>
    %c0_3 = arith.constant 0 : index
    %c0_4 = arith.constant 0 : index
    %c0_5 = arith.constant 0 : index
    %c0_6 = arith.constant 0 : index
    %7 = vector.load %arg4[%c0_3, %c0_4, %c0_5, %c0_6] : memref<1x4x2x128xf32, #tpu.memory_space<vmem>>, vector<1x1x2x128xf32>
    %8 = vector.shape_cast %7 : vector<1x1x2x128xf32> to vector<2x128xf32>
    %c0_i32_7 = arith.constant 0 : i32
    %9 = vector.broadcast %c0_i32_7 : i32 to vector<2x128xi32>
    %10 = arith.cmpi eq, %6, %9 : vector<2x128xi32>
    %11 = arith.extui %10 : vector<2x128xi1> to vector<2x128xi32>
    %12 = arith.sitofp %11 : vector<2x128xi32> to vector<2x128xf32>
    %c0_8 = arith.constant 0 : index
    %c0_9 = arith.constant 0 : index
    %13 = vector.load %arg7[%c0_8, %c0_9] : memref<4x128xf32, #tpu.memory_space<vmem>>, vector<1x128xf32>
    %14 = arith.mulf %8, %12 : vector<2x128xf32>
    %cst = arith.constant dense<0.000000e+00> : vector<128xf32>
    %15 = vector.multi_reduction <add>, %14, %cst [0] : vector<2x128xf32> to vector<128xf32>
    %16 = vector.shape_cast %15 : vector<128xf32> to vector<1x128xf32>
    %17 = arith.addf %13, %16 : vector<1x128xf32>
    %c0_10 = arith.constant 0 : index
    %c0_11 = arith.constant 0 : index
    %18 = vector.load %arg7[%c0_10, %c0_11] : memref<4x128xf32, #tpu.memory_space<vmem>>, vector<1x128xf32>
    tpu.vector_store %arg7[%c0_10, %c0_11], %17 {strides = array<i32>} : memref<4x128xf32, #tpu.memory_space<vmem>>, vector<1x128xf32>,
    %c0_12 = arith.constant 0 : index
    %c0_13 = arith.constant 0 : index
    %19 = vector.load %arg8[%c0_12, %c0_13] : memref<4x128xf32, #tpu.memory_space<vmem>>, vector<1x128xf32>
    %20 = arith.mulf %8, %8 : vector<2x128xf32>
    %cst_14 = arith.constant dense<0.000000e+00> : vector<128xf32>
    %21 = vector.multi_reduction <add>, %20, %cst_14 [0] : vector<2x128xf32> to vector<128xf32>
    %22 = vector.shape_cast %21 : vector<128xf32> to vector<1x128xf32>
    %23 = arith.addf %19, %22 : vector<1x128xf32>
    %c0_15 = arith.constant 0 : index
    %c0_16 = arith.constant 0 : index
    %24 = vector.load %arg8[%c0_15, %c0_16] : memref<4x128xf32, #tpu.memory_space<vmem>>, vector<1x128xf32>
    tpu.vector_store %arg8[%c0_15, %c0_16], %23 {strides = array<i32>} : memref<4x128xf32, #tpu.memory_space<vmem>>, vector<1x128xf32>,
    %c0_17 = arith.constant 0 : index
    %c0_18 = arith.constant 0 : index
    %25 = vector.load %arg9[%c0_17, %c0_18] : memref<4x128xf32, #tpu.memory_space<vmem>>, vector<1x128xf32>
    %cst_19 = arith.constant dense<0.000000e+00> : vector<128xf32>
    %26 = vector.multi_reduction <add>, %12, %cst_19 [0] : vector<2x128xf32> to vector<128xf32>
    %27 = vector.shape_cast %26 : vector<128xf32> to vector<1x128xf32>
    %28 = arith.addf %25, %27 : vector<1x128xf32>
    %c0_20 = arith.constant 0 : index
    %c0_21 = arith.constant 0 : index
    %29 = vector.load %arg9[%c0_20, %c0_21] : memref<4x128xf32, #tpu.memory_space<vmem>>, vector<1x128xf32>
    tpu.vector_store %arg9[%c0_20, %c0_21], %28 {strides = array<i32>} : memref<4x128xf32, #tpu.memory_space<vmem>>, vector<1x128xf32>,
    %c0_22 = arith.constant 0 : index
    %c1 = arith.constant 1 : index
    %c0_23 = arith.constant 0 : index
    %c0_24 = arith.constant 0 : index
    %30 = vector.load %arg4[%c0_22, %c1, %c0_23, %c0_24] : memref<1x4x2x128xf32, #tpu.memory_space<vmem>>, vector<1x1x2x128xf32>
    %31 = vector.shape_cast %30 : vector<1x1x2x128xf32> to vector<2x128xf32>
    %c1_i32_25 = arith.constant 1 : i32
    %32 = vector.broadcast %c1_i32_25 : i32 to vector<2x128xi32>
    %33 = arith.cmpi eq, %6, %32 : vector<2x128xi32>
    %34 = arith.extui %33 : vector<2x128xi1> to vector<2x128xi32>
    %35 = arith.sitofp %34 : vector<2x128xi32> to vector<2x128xf32>
    %c1_26 = arith.constant 1 : index
    %c0_27 = arith.constant 0 : index
    %36 = vector.load %arg7[%c1_26, %c0_27] : memref<4x128xf32, #tpu.memory_space<vmem>>, vector<1x128xf32>
    %37 = arith.mulf %31, %35 : vector<2x128xf32>
    %cst_28 = arith.constant dense<0.000000e+00> : vector<128xf32>
    %38 = vector.multi_reduction <add>, %37, %cst_28 [0] : vector<2x128xf32> to vector<128xf32>
    %39 = vector.shape_cast %38 : vector<128xf32> to vector<1x128xf32>
    %40 = arith.addf %36, %39 : vector<1x128xf32>
    %c1_29 = arith.constant 1 : index
    %c0_30 = arith.constant 0 : index
    %41 = vector.load %arg7[%c1_29, %c0_30] : memref<4x128xf32, #tpu.memory_space<vmem>>, vector<1x128xf32>
    tpu.vector_store %arg7[%c1_29, %c0_30], %40 {strides = array<i32>} : memref<4x128xf32, #tpu.memory_space<vmem>>, vector<1x128xf32>,
    %c1_31 = arith.constant 1 : index
    %c0_32 = arith.constant 0 : index
    %42 = vector.load %arg8[%c1_31, %c0_32] : memref<4x128xf32, #tpu.memory_space<vmem>>, vector<1x128xf32>
    %43 = arith.mulf %31, %31 : vector<2x128xf32>
    %cst_33 = arith.constant dense<0.000000e+00> : vector<128xf32>
    %44 = vector.multi_reduction <add>, %43, %cst_33 [0] : vector<2x128xf32> to vector<128xf32>
    %45 = vector.shape_cast %44 : vector<128xf32> to vector<1x128xf32>
    %46 = arith.addf %42, %45 : vector<1x128xf32>
    %c1_34 = arith.constant 1 : index
    %c0_35 = arith.constant 0 : index
    %47 = vector.load %arg8[%c1_34, %c0_35] : memref<4x128xf32, #tpu.memory_space<vmem>>, vector<1x128xf32>
    tpu.vector_store %arg8[%c1_34, %c0_35], %46 {strides = array<i32>} : memref<4x128xf32, #tpu.memory_space<vmem>>, vector<1x128xf32>,
    %c1_36 = arith.constant 1 : index
    %c0_37 = arith.constant 0 : index
    %48 = vector.load %arg9[%c1_36, %c0_37] : memref<4x128xf32, #tpu.memory_space<vmem>>, vector<1x128xf32>
    %cst_38 = arith.constant dense<0.000000e+00> : vector<128xf32>
    %49 = vector.multi_reduction <add>, %35, %cst_38 [0] : vector<2x128xf32> to vector<128xf32>
    %50 = vector.shape_cast %49 : vector<128xf32> to vector<1x128xf32>
    %51 = arith.addf %48, %50 : vector<1x128xf32>
    %c1_39 = arith.constant 1 : index
    %c0_40 = arith.constant 0 : index
    %52 = vector.load %arg9[%c1_39, %c0_40] : memref<4x128xf32, #tpu.memory_space<vmem>>, vector<1x128xf32>
    tpu.vector_store %arg9[%c1_39, %c0_40], %51 {strides = array<i32>} : memref<4x128xf32, #tpu.memory_space<vmem>>, vector<1x128xf32>,
    %c0_41 = arith.constant 0 : index
    %c2 = arith.constant 2 : index
    %c0_42 = arith.constant 0 : index
    %c0_43 = arith.constant 0 : index
    %53 = vector.load %arg4[%c0_41, %c2, %c0_42, %c0_43] : memref<1x4x2x128xf32, #tpu.memory_space<vmem>>, vector<1x1x2x128xf32>
    %54 = vector.shape_cast %53 : vector<1x1x2x128xf32> to vector<2x128xf32>
    %c2_i32 = arith.constant 2 : i32
    %55 = vector.broadcast %c2_i32 : i32 to vector<2x128xi32>
    %56 = arith.cmpi eq, %6, %55 : vector<2x128xi32>
    %57 = arith.extui %56 : vector<2x128xi1> to vector<2x128xi32>
    %58 = arith.sitofp %57 : vector<2x128xi32> to vector<2x128xf32>
    %c2_44 = arith.constant 2 : index
    %c0_45 = arith.constant 0 : index
    %59 = vector.load %arg7[%c2_44, %c0_45] : memref<4x128xf32, #tpu.memory_space<vmem>>, vector<1x128xf32>
    %60 = arith.mulf %54, %58 : vector<2x128xf32>
    %cst_46 = arith.constant dense<0.000000e+00> : vector<128xf32>
    %61 = vector.multi_reduction <add>, %60, %cst_46 [0] : vector<2x128xf32> to vector<128xf32>
    %62 = vector.shape_cast %61 : vector<128xf32> to vector<1x128xf32>
    %63 = arith.addf %59, %62 : vector<1x128xf32>
    %c2_47 = arith.constant 2 : index
    %c0_48 = arith.constant 0 : index
    %64 = vector.load %arg7[%c2_47, %c0_48] : memref<4x128xf32, #tpu.memory_space<vmem>>, vector<1x128xf32>
    tpu.vector_store %arg7[%c2_47, %c0_48], %63 {strides = array<i32>} : memref<4x128xf32, #tpu.memory_space<vmem>>, vector<1x128xf32>,
    %c2_49 = arith.constant 2 : index
    %c0_50 = arith.constant 0 : index
    %65 = vector.load %arg8[%c2_49, %c0_50] : memref<4x128xf32, #tpu.memory_space<vmem>>, vector<1x128xf32>
    %66 = arith.mulf %54, %54 : vector<2x128xf32>
    %cst_51 = arith.constant dense<0.000000e+00> : vector<128xf32>
    %67 = vector.multi_reduction <add>, %66, %cst_51 [0] : vector<2x128xf32> to vector<128xf32>
    %68 = vector.shape_cast %67 : vector<128xf32> to vector<1x128xf32>
    %69 = arith.addf %65, %68 : vector<1x128xf32>
    %c2_52 = arith.constant 2 : index
    %c0_53 = arith.constant 0 : index
    %70 = vector.load %arg8[%c2_52, %c0_53] : memref<4x128xf32, #tpu.memory_space<vmem>>, vector<1x128xf32>
    tpu.vector_store %arg8[%c2_52, %c0_53], %69 {strides = array<i32>} : memref<4x128xf32, #tpu.memory_space<vmem>>, vector<1x128xf32>,
    %c2_54 = arith.constant 2 : index
    %c0_55 = arith.constant 0 : index
    %71 = vector.load %arg9[%c2_54, %c0_55] : memref<4x128xf32, #tpu.memory_space<vmem>>, vector<1x128xf32>
    %cst_56 = arith.constant dense<0.000000e+00> : vector<128xf32>
    %72 = vector.multi_reduction <add>, %58, %cst_56 [0] : vector<2x128xf32> to vector<128xf32>
    %73 = vector.shape_cast %72 : vector<128xf32> to vector<1x128xf32>
    %74 = arith.addf %71, %73 : vector<1x128xf32>
    %c2_57 = arith.constant 2 : index
    %c0_58 = arith.constant 0 : index
    %75 = vector.load %arg9[%c2_57, %c0_58] : memref<4x128xf32, #tpu.memory_space<vmem>>, vector<1x128xf32>
    tpu.vector_store %arg9[%c2_57, %c0_58], %74 {strides = array<i32>} : memref<4x128xf32, #tpu.memory_space<vmem>>, vector<1x128xf32>,
    %c0_59 = arith.constant 0 : index
    %c3 = arith.constant 3 : index
    %c0_60 = arith.constant 0 : index
    %c0_61 = arith.constant 0 : index
    %76 = vector.load %arg4[%c0_59, %c3, %c0_60, %c0_61] : memref<1x4x2x128xf32, #tpu.memory_space<vmem>>, vector<1x1x2x128xf32>
    %77 = vector.shape_cast %76 : vector<1x1x2x128xf32> to vector<2x128xf32>
    %c3_i32 = arith.constant 3 : i32
    %78 = vector.broadcast %c3_i32 : i32 to vector<2x128xi32>
    %79 = arith.cmpi eq, %6, %78 : vector<2x128xi32>
    %80 = arith.extui %79 : vector<2x128xi1> to vector<2x128xi32>
    %81 = arith.sitofp %80 : vector<2x128xi32> to vector<2x128xf32>
    %c3_62 = arith.constant 3 : index
    %c0_63 = arith.constant 0 : index
    %82 = vector.load %arg7[%c3_62, %c0_63] : memref<4x128xf32, #tpu.memory_space<vmem>>, vector<1x128xf32>
    %83 = arith.mulf %77, %81 : vector<2x128xf32>
    %cst_64 = arith.constant dense<0.000000e+00> : vector<128xf32>
    %84 = vector.multi_reduction <add>, %83, %cst_64 [0] : vector<2x128xf32> to vector<128xf32>
    %85 = vector.shape_cast %84 : vector<128xf32> to vector<1x128xf32>
    %86 = arith.addf %82, %85 : vector<1x128xf32>
    %c3_65 = arith.constant 3 : index
    %c0_66 = arith.constant 0 : index
    %87 = vector.load %arg7[%c3_65, %c0_66] : memref<4x128xf32, #tpu.memory_space<vmem>>, vector<1x128xf32>
    tpu.vector_store %arg7[%c3_65, %c0_66], %86 {strides = array<i32>} : memref<4x128xf32, #tpu.memory_space<vmem>>, vector<1x128xf32>,
    %c3_67 = arith.constant 3 : index
    %c0_68 = arith.constant 0 : index
    %88 = vector.load %arg8[%c3_67, %c0_68] : memref<4x128xf32, #tpu.memory_space<vmem>>, vector<1x128xf32>
    %89 = arith.mulf %77, %77 : vector<2x128xf32>
    %cst_69 = arith.constant dense<0.000000e+00> : vector<128xf32>
    %90 = vector.multi_reduction <add>, %89, %cst_69 [0] : vector<2x128xf32> to vector<128xf32>
    %91 = vector.shape_cast %90 : vector<128xf32> to vector<1x128xf32>
    %92 = arith.addf %88, %91 : vector<1x128xf32>
    %c3_70 = arith.constant 3 : index
    %c0_71 = arith.constant 0 : index
    %93 = vector.load %arg8[%c3_70, %c0_71] : memref<4x128xf32, #tpu.memory_space<vmem>>, vector<1x128xf32>
    tpu.vector_store %arg8[%c3_70, %c0_71], %92 {strides = array<i32>} : memref<4x128xf32, #tpu.memory_space<vmem>>, vector<1x128xf32>,
    %c3_72 = arith.constant 3 : index
    %c0_73 = arith.constant 0 : index
    %94 = vector.load %arg9[%c3_72, %c0_73] : memref<4x128xf32, #tpu.memory_space<vmem>>, vector<1x128xf32>
    %cst_74 = arith.constant dense<0.000000e+00> : vector<128xf32>
    %95 = vector.multi_reduction <add>, %81, %cst_74 [0] : vector<2x128xf32> to vector<128xf32>
    %96 = vector.shape_cast %95 : vector<128xf32> to vector<1x128xf32>
    %97 = arith.addf %94, %96 : vector<1x128xf32>
    %c3_75 = arith.constant 3 : index
    %c0_76 = arith.constant 0 : index
    %98 = vector.load %arg9[%c3_75, %c0_76] : memref<4x128xf32, #tpu.memory_space<vmem>>, vector<1x128xf32>
    tpu.vector_store %arg9[%c3_75, %c0_76], %97 {strides = array<i32>} : memref<4x128xf32, #tpu.memory_space<vmem>>, vector<1x128xf32>,
    %c1_i32_77 = arith.constant 1 : i32
    %99 = arith.cmpi eq, %1, %c1_i32_77 : i32
    %100 = arith.extui %99 : i1 to i32
    %c0_i32_78 = arith.constant 0 : i32
    %101 = arith.cmpi ne, %100, %c0_i32_78 : i32
    scf.if %101 {
      %c0_79 = arith.constant 0 : index
      %c0_80 = arith.constant 0 : index
      %102 = vector.load %arg7[%c0_79, %c0_80] : memref<4x128xf32, #tpu.memory_space<vmem>>, vector<1x128xf32>
      %103 = vector.shape_cast %102 : vector<1x128xf32> to vector<1x1x128xf32>
      %cst_81 = arith.constant dense<0.000000e+00> : vector<1xf32>
      %104 = vector.multi_reduction <add>, %103, %cst_81 [1, 2] : vector<1x1x128xf32> to vector<1xf32>
      %105 = vector.shape_cast %104 : vector<1xf32> to vector<1x1x1xf32>
      %106 = vector.extract %105[0, 0, 0] : f32 from vector<1x1x1xf32>
      %c0_82 = arith.constant 0 : index
      %c0_83 = arith.constant 0 : index
      %107 = vector.load %arg8[%c0_82, %c0_83] : memref<4x128xf32, #tpu.memory_space<vmem>>, vector<1x128xf32>
      %108 = vector.shape_cast %107 : vector<1x128xf32> to vector<1x1x128xf32>
      %cst_84 = arith.constant dense<0.000000e+00> : vector<1xf32>
      %109 = vector.multi_reduction <add>, %108, %cst_84 [1, 2] : vector<1x1x128xf32> to vector<1xf32>
      %110 = vector.shape_cast %109 : vector<1xf32> to vector<1x1x1xf32>
      %111 = vector.extract %110[0, 0, 0] : f32 from vector<1x1x1xf32>
      %c0_85 = arith.constant 0 : index
      %c0_86 = arith.constant 0 : index
      %112 = vector.load %arg9[%c0_85, %c0_86] : memref<4x128xf32, #tpu.memory_space<vmem>>, vector<1x128xf32>
      %113 = vector.shape_cast %112 : vector<1x128xf32> to vector<1x1x128xf32>
      %cst_87 = arith.constant dense<0.000000e+00> : vector<1xf32>
      %114 = vector.multi_reduction <add>, %113, %cst_87 [1, 2] : vector<1x1x128xf32> to vector<1xf32>
      %115 = vector.shape_cast %114 : vector<1xf32> to vector<1x1x1xf32>
      %116 = vector.extract %115[0, 0, 0] : f32 from vector<1x1x1xf32>
      %cst_88 = arith.constant 2.000000e+00 : f32
      %117 = arith.mulf %cst_88, %106 : f32
      %cst_89 = arith.constant 9.99999974E-6 : f32
      %118 = arith.addf %117, %cst_89 : f32
      %119 = arith.addf %111, %116 : f32
      %cst_90 = arith.constant 9.99999974E-6 : f32
      %120 = arith.addf %119, %cst_90 : f32
      %121 = arith.divf %118, %120 : f32
      %c0_91 = arith.constant 0 : index
      %122 = memref.load %arg6[%c0_91] : memref<4xf32, #tpu.memory_space<smem>>
      memref.store %121, %arg6[%c0_91] : memref<4xf32, #tpu.memory_space<smem>>
      %cst_92 = arith.constant 1.000000e+00 : f32
      %123 = arith.subf %cst_92, %121 : f32
      %c0_93 = arith.constant 0 : index
      %124 = memref.load %arg2[%c0_93] : memref<4xf32, #tpu.memory_space<smem>>
      %125 = arith.mulf %123, %124 : f32
      %cst_94 = arith.constant 0.000000e+00 : f32
      %126 = arith.addf %cst_94, %125 : f32
      %c1_95 = arith.constant 1 : index
      %c0_96 = arith.constant 0 : index
      %127 = vector.load %arg7[%c1_95, %c0_96] : memref<4x128xf32, #tpu.memory_space<vmem>>, vector<1x128xf32>
      %128 = vector.shape_cast %127 : vector<1x128xf32> to vector<1x1x128xf32>
      %cst_97 = arith.constant dense<0.000000e+00> : vector<1xf32>
      %129 = vector.multi_reduction <add>, %128, %cst_97 [1, 2] : vector<1x1x128xf32> to vector<1xf32>
      %130 = vector.shape_cast %129 : vector<1xf32> to vector<1x1x1xf32>
      %131 = vector.extract %130[0, 0, 0] : f32 from vector<1x1x1xf32>
      %c1_98 = arith.constant 1 : index
      %c0_99 = arith.constant 0 : index
      %132 = vector.load %arg8[%c1_98, %c0_99] : memref<4x128xf32, #tpu.memory_space<vmem>>, vector<1x128xf32>
      %133 = vector.shape_cast %132 : vector<1x128xf32> to vector<1x1x128xf32>
      %cst_100 = arith.constant dense<0.000000e+00> : vector<1xf32>
      %134 = vector.multi_reduction <add>, %133, %cst_100 [1, 2] : vector<1x1x128xf32> to vector<1xf32>
      %135 = vector.shape_cast %134 : vector<1xf32> to vector<1x1x1xf32>
      %136 = vector.extract %135[0, 0, 0] : f32 from vector<1x1x1xf32>
      %c1_101 = arith.constant 1 : index
      %c0_102 = arith.constant 0 : index
      %137 = vector.load %arg9[%c1_101, %c0_102] : memref<4x128xf32, #tpu.memory_space<vmem>>, vector<1x128xf32>
      %138 = vector.shape_cast %137 : vector<1x128xf32> to vector<1x1x128xf32>
      %cst_103 = arith.constant dense<0.000000e+00> : vector<1xf32>
      %139 = vector.multi_reduction <add>, %138, %cst_103 [1, 2] : vector<1x1x128xf32> to vector<1xf32>
      %140 = vector.shape_cast %139 : vector<1xf32> to vector<1x1x1xf32>
      %141 = vector.extract %140[0, 0, 0] : f32 from vector<1x1x1xf32>
      %cst_104 = arith.constant 2.000000e+00 : f32
      %142 = arith.mulf %cst_104, %131 : f32
      %cst_105 = arith.constant 9.99999974E-6 : f32
      %143 = arith.addf %142, %cst_105 : f32
      %144 = arith.addf %136, %141 : f32
      %cst_106 = arith.constant 9.99999974E-6 : f32
      %145 = arith.addf %144, %cst_106 : f32
      %146 = arith.divf %143, %145 : f32
      %c1_107 = arith.constant 1 : index
      %147 = memref.load %arg6[%c1_107] : memref<4xf32, #tpu.memory_space<smem>>
      memref.store %146, %arg6[%c1_107] : memref<4xf32, #tpu.memory_space<smem>>
      %cst_108 = arith.constant 1.000000e+00 : f32
      %148 = arith.subf %cst_108, %146 : f32
      %c1_109 = arith.constant 1 : index
      %149 = memref.load %arg2[%c1_109] : memref<4xf32, #tpu.memory_space<smem>>
      %150 = arith.mulf %148, %149 : f32
      %151 = arith.addf %126, %150 : f32
      %c2_110 = arith.constant 2 : index
      %c0_111 = arith.constant 0 : index
      %152 = vector.load %arg7[%c2_110, %c0_111] : memref<4x128xf32, #tpu.memory_space<vmem>>, vector<1x128xf32>
      %153 = vector.shape_cast %152 : vector<1x128xf32> to vector<1x1x128xf32>
      %cst_112 = arith.constant dense<0.000000e+00> : vector<1xf32>
      %154 = vector.multi_reduction <add>, %153, %cst_112 [1, 2] : vector<1x1x128xf32> to vector<1xf32>
      %155 = vector.shape_cast %154 : vector<1xf32> to vector<1x1x1xf32>
      %156 = vector.extract %155[0, 0, 0] : f32 from vector<1x1x1xf32>
      %c2_113 = arith.constant 2 : index
      %c0_114 = arith.constant 0 : index
      %157 = vector.load %arg8[%c2_113, %c0_114] : memref<4x128xf32, #tpu.memory_space<vmem>>, vector<1x128xf32>
      %158 = vector.shape_cast %157 : vector<1x128xf32> to vector<1x1x128xf32>
      %cst_115 = arith.constant dense<0.000000e+00> : vector<1xf32>
      %159 = vector.multi_reduction <add>, %158, %cst_115 [1, 2] : vector<1x1x128xf32> to vector<1xf32>
      %160 = vector.shape_cast %159 : vector<1xf32> to vector<1x1x1xf32>
      %161 = vector.extract %160[0, 0, 0] : f32 from vector<1x1x1xf32>
      %c2_116 = arith.constant 2 : index
      %c0_117 = arith.constant 0 : index
      %162 = vector.load %arg9[%c2_116, %c0_117] : memref<4x128xf32, #tpu.memory_space<vmem>>, vector<1x128xf32>
      %163 = vector.shape_cast %162 : vector<1x128xf32> to vector<1x1x128xf32>
      %cst_118 = arith.constant dense<0.000000e+00> : vector<1xf32>
      %164 = vector.multi_reduction <add>, %163, %cst_118 [1, 2] : vector<1x1x128xf32> to vector<1xf32>
      %165 = vector.shape_cast %164 : vector<1xf32> to vector<1x1x1xf32>
      %166 = vector.extract %165[0, 0, 0] : f32 from vector<1x1x1xf32>
      %cst_119 = arith.constant 2.000000e+00 : f32
      %167 = arith.mulf %cst_119, %156 : f32
      %cst_120 = arith.constant 9.99999974E-6 : f32
      %168 = arith.addf %167, %cst_120 : f32
      %169 = arith.addf %161, %166 : f32
      %cst_121 = arith.constant 9.99999974E-6 : f32
      %170 = arith.addf %169, %cst_121 : f32
      %171 = arith.divf %168, %170 : f32
      %c2_122 = arith.constant 2 : index
      %172 = memref.load %arg6[%c2_122] : memref<4xf32, #tpu.memory_space<smem>>
      memref.store %171, %arg6[%c2_122] : memref<4xf32, #tpu.memory_space<smem>>
      %cst_123 = arith.constant 1.000000e+00 : f32
      %173 = arith.subf %cst_123, %171 : f32
      %c2_124 = arith.constant 2 : index
      %174 = memref.load %arg2[%c2_124] : memref<4xf32, #tpu.memory_space<smem>>
      %175 = arith.mulf %173, %174 : f32
      %176 = arith.addf %151, %175 : f32
      %c3_125 = arith.constant 3 : index
      %c0_126 = arith.constant 0 : index
      %177 = vector.load %arg7[%c3_125, %c0_126] : memref<4x128xf32, #tpu.memory_space<vmem>>, vector<1x128xf32>
      %178 = vector.shape_cast %177 : vector<1x128xf32> to vector<1x1x128xf32>
      %cst_127 = arith.constant dense<0.000000e+00> : vector<1xf32>
      %179 = vector.multi_reduction <add>, %178, %cst_127 [1, 2] : vector<1x1x128xf32> to vector<1xf32>
      %180 = vector.shape_cast %179 : vector<1xf32> to vector<1x1x1xf32>
      %181 = vector.extract %180[0, 0, 0] : f32 from vector<1x1x1xf32>
      %c3_128 = arith.constant 3 : index
      %c0_129 = arith.constant 0 : index
      %182 = vector.load %arg8[%c3_128, %c0_129] : memref<4x128xf32, #tpu.memory_space<vmem>>, vector<1x128xf32>
      %183 = vector.shape_cast %182 : vector<1x128xf32> to vector<1x1x128xf32>
      %cst_130 = arith.constant dense<0.000000e+00> : vector<1xf32>
      %184 = vector.multi_reduction <add>, %183, %cst_130 [1, 2] : vector<1x1x128xf32> to vector<1xf32>
      %185 = vector.shape_cast %184 : vector<1xf32> to vector<1x1x1xf32>
      %186 = vector.extract %185[0, 0, 0] : f32 from vector<1x1x1xf32>
      %c3_131 = arith.constant 3 : index
      %c0_132 = arith.constant 0 : index
      %187 = vector.load %arg9[%c3_131, %c0_132] : memref<4x128xf32, #tpu.memory_space<vmem>>, vector<1x128xf32>
      %188 = vector.shape_cast %187 : vector<1x128xf32> to vector<1x1x128xf32>
      %cst_133 = arith.constant dense<0.000000e+00> : vector<1xf32>
      %189 = vector.multi_reduction <add>, %188, %cst_133 [1, 2] : vector<1x1x128xf32> to vector<1xf32>
      %190 = vector.shape_cast %189 : vector<1xf32> to vector<1x1x1xf32>
      %191 = vector.extract %190[0, 0, 0] : f32 from vector<1x1x1xf32>
      %cst_134 = arith.constant 2.000000e+00 : f32
      %192 = arith.mulf %cst_134, %181 : f32
      %cst_135 = arith.constant 9.99999974E-6 : f32
      %193 = arith.addf %192, %cst_135 : f32
      %194 = arith.addf %186, %191 : f32
      %cst_136 = arith.constant 9.99999974E-6 : f32
      %195 = arith.addf %194, %cst_136 : f32
      %196 = arith.divf %193, %195 : f32
      %c3_137 = arith.constant 3 : index
      %197 = memref.load %arg6[%c3_137] : memref<4xf32, #tpu.memory_space<smem>>
      memref.store %196, %arg6[%c3_137] : memref<4xf32, #tpu.memory_space<smem>>
      %cst_138 = arith.constant 1.000000e+00 : f32
      %198 = arith.subf %cst_138, %196 : f32
      %c3_139 = arith.constant 3 : index
      %199 = memref.load %arg2[%c3_139] : memref<4xf32, #tpu.memory_space<smem>>
      %200 = arith.mulf %198, %199 : f32
      %201 = arith.addf %176, %200 : f32
      %cst_140 = arith.constant 4.000000e+00 : f32
      %202 = arith.divf %201, %cst_140 : f32
      %c0_141 = arith.constant 0 : index
      %203 = memref.load %arg5[%c0_141] : memref<1xf32, #tpu.memory_space<smem>>
      memref.store %202, %arg5[%c0_141] : memref<1xf32, #tpu.memory_space<smem>>
    } else {
    }
    return
  }
  func.func @transform_0(%arg0: i32, %arg1: i32) -> i32 {
    %c0_i32 = arith.constant 0 : i32
    %c0_i32_0 = arith.constant 0 : i32
    return %c0_i32 : i32
  }
  func.func @transform_1(%arg0: i32, %arg1: i32) -> (i32, i32, i32) {
    %c0_i32 = arith.constant 0 : i32
    %c0_i32_0 = arith.constant 0 : i32
    return %arg0, %arg1, %c0_i32 : i32, i32, i32
  }
  func.func @transform_2(%arg0: i32, %arg1: i32) -> (i32, i32, i32, i32) {
    %c0_i32 = arith.constant 0 : i32
    %c0_i32_0 = arith.constant 0 : i32
    %c0_i32_1 = arith.constant 0 : i32
    return %arg0, %c0_i32, %arg1, %c0_i32_0 : i32, i32, i32, i32
  }
  func.func @transform_3(%arg0: i32, %arg1: i32) -> i32 {
    %c0_i32 = arith.constant 0 : i32
    %c0_i32_0 = arith.constant 0 : i32
    return %c0_i32 : i32
  }
  func.func @transform_4(%arg0: i32, %arg1: i32) -> i32 {
    %c0_i32 = arith.constant 0 : i32
    %c0_i32_0 = arith.constant 0 : i32
    return %c0_i32 : i32
  }
}

</mosaic_0001>

<llo_original>
// kernel: tpu_custom_call.1
$region0: #{tpu_custom_call.1}
  #allocation0 [shape = 'u32[]', space=smem, size = 0x4, offset = 0x4, fixed_abs, tag = 'smem constant byte address 0x4 - core index']
  #allocation1 [shape = 'u32[72,128]{1,0:T(1,128)}', space=vmem, size = 0x9000, scoped, tag = 'internal scratch']
  #allocation2 [shape = 'f32[4,128]{1,0:T(4,128)}', space=vmem, size = 0x800, scoped, tag = 'scratch operand']
  #allocation3 [shape = 'f32[4,128]{1,0:T(4,128)}', space=vmem, size = 0x800, scoped, tag = 'scratch operand']
  #allocation4 [shape = 'f32[4,128]{1,0:T(4,128)}', space=vmem, size = 0x800, scoped, tag = 'scratch operand']
  %s0 = inlined_call_operand.hbm [shape: f32[4], index: 0, kind: input, shape index: {}]
  %s1 = inlined_call_operand.hbm [shape: s32[2,2,128], index: 1, kind: input, shape index: {}]
  %s2 = inlined_call_operand.hbm [shape: f32[2,4,2,128], index: 2, kind: input, shape index: {}]
  %s3 = inlined_call_operand.hbm [shape: f32[1], index: 3, kind: output, shape index: {0}]
  %s4 = inlined_call_operand.hbm [shape: f32[4], index: 4, kind: output, shape index: {1}]
  %5 = xla_tuple %s3, %s4
  %s6 = sld [smem:[#allocation0]]
  $region73: #{tpu_custom_call.1} parent=0
    _
  %s8 = ssub.s32 1, %s6
  %s9 = scalar_select 0, %s8, %s6
  $region1: #{tpu_custom_call.1} parent=0
    #allocation5 [shape = 'u8[512]{0}', space=smem, size = 0x200, scoped, tag = 'input window, operand 0, single buffered']
    #allocation6 [shape = 's32[2]{0}', space=sflag, size = 0x8, scoped, tag = 'scoped memory for tpu_custom_call.1']
    #allocation7 [shape = 's32[2]{0}', space=sflag, size = 0x8, scoped, tag = 'scoped memory for tpu_custom_call.1']
    #allocation8 [shape = 's32[2]{0}', space=sflag, size = 0x8, scoped, tag = 'scoped memory for tpu_custom_call.1']
    #allocation9 [shape = 'u8[2048]{0}', space=vmem, size = 0x800, scoped, tag = 'input window, operand 1']
    #allocation10 [shape = 'u8[8192]{0}', space=vmem, size = 0x2000, scoped, tag = 'input window, operand 2']
    #allocation11 [shape = 's32[2]{0}', space=sflag, size = 0x8, scoped, tag = 'scoped memory for tpu_custom_call.1']
    #allocation12 [shape = 'u8[512]{0}', space=smem, size = 0x200, scoped, tag = 'output window, operand 0, single buffered']
    #allocation13 [shape = 'u8[512]{0}', space=smem, size = 0x200, scoped, tag = 'output window, operand 1, single buffered']
    #allocation14 [shape = 's32[1]{0}', space=sflag, size = 0x4, scoped, tag = 'scoped memory for tpu_custom_call.1']
    %10 = vsyncpa [#allocation7], 0
    %11 = vsyncpa [#allocation6], 0
    %s12 = scalar_lea.sflag [#allocation6], 1
    %13 = vsyncpa %s12, 0
    %14 = vsyncpa [#allocation11], 0
    %s15 = scalar_lea.sflag [#allocation11], 1
    %16 = vsyncpa %s15, 0
    %17 = vsyncpa [#allocation8], 0
    %18 = vsyncpa [#allocation14], 0
    loop: start=0, step=1, limit=4
    $region2: #{tpu_custom_call.1} parent=1 // loop_pre_header
      _
    $region3: #{tpu_custom_call.1} parent=1 // loop_header
      %s20 = sphi 0, %s24
      %p21 = scmp.ge.s32.totalorder %s20, 4
      %s27 = sphi 0, %s39
      %s28 = sphi 0, %s35
      %s29 = sphi 0, %s27
      %s30 = sphi 0, %s28
      %s31 = sphi 0, %s29
      %s32 = sphi 0, %s30
      %s40 = sphi 0, %s40
      %s42 = sphi 0, %s40
      %s43 = sphi 0, %s42
      %s57 = sphi 0, %s43
      %s65 = sphi 0, %s67
      %s68 = sphi 0, %s65
      %s69 = sphi 0, %s68
      %s85 = sphi 0, %s69
      %s93 = sphi 0, %s95
      %s96 = sphi 0, %s93
      %s97 = sphi 0, %s96
      %s113 = sphi 0, %s97
      %s117 = sphi 0, %s117
      %s119 = sphi 0, %s117
      %s120 = sphi 0, %s119
      %s134 = sphi 0, %s120
      %s138 = sphi 0, %s138
      %s140 = sphi 0, %s138
      %s141 = sphi 0, %s140
      %s155 = sphi 0, %s141
    $region4: #{tpu_custom_call.1} parent=1 // loop_header_branch
      %23 = sbr.rel (%p21) target = $region8
    $region5: #{tpu_custom_call.1} parent=1 // loop_body
      %s25 = ssub.s32 %s20, 1
      %s26 = ssub.s32 %s20, 2
      %s33 = sadd.s32 1, %s28
      %p34 = scmp.ge.s32.totalorder %s33, 1
      %s35 = scalar_select %p34, 0, %s33
      %s36 = sadd.s32 1, %s27
      %s37 = scalar_select %p34, %s36, %s27
      %p38 = scmp.ge.s32.totalorder %s37, 2
      %s39 = scalar_select %p38, 0, %s37
      %s41 = sadd.s32 %s40, 1
      %p44 = scmp.eq.s32.totalorder %s20, 1
      %p45 = scmp.ne.s32.totalorder %s40, %s42
      %p46 = scmp.eq.s32.totalorder %s20, 0
      %p47 = por %p45, %p46
      %p48 = scmp.ne.s32.totalorder %s40, %s42
      %p49 = scmp.eq.s32.totalorder %s25, 1
      %p50 = por %p48, %p49
      %p51 = scmp.ne.s32.totalorder %s42, %s43
      %p52 = scmp.eq.s32.totalorder %s25, 0
      %p53 = por %p51, %p52
      %p54 = scmp.ne.s32.totalorder %s42, %s43
      %p55 = scmp.eq.s32.totalorder %s26, 1
      %p56 = por %p54, %p55
      %p58 = scmp.ne.s32.totalorder %s43, %s57
      %p59 = scmp.eq.s32.totalorder %s26, 0
      %p60 = por %p58, %p59
      %s61 = ssub.s32 %s27, %s39
      %s62 = ssub.s32 %s28, %s35
      %s63 = sor.u32 %s61, %s62
      %p64 = scmp.eq.s32.totalorder %s63, 0
      %s66 = sadd.s32 %s65, 1
      %s67 = scalar_select %p64, %s65, %s66
      %p70 = pneg %p64
      %p71 = scmp.eq.s32.totalorder %s20, 1
      %p72 = por %p70, %p71
      %p73 = scmp.ne.s32.totalorder %s65, %s68
      %p74 = scmp.eq.s32.totalorder %s20, 0
      %p75 = por %p73, %p74
      %p76 = scmp.ne.s32.totalorder %s65, %s68
      %p77 = scmp.eq.s32.totalorder %s25, 1
      %p78 = por %p76, %p77
      %p79 = scmp.ne.s32.totalorder %s68, %s69
      %p80 = scmp.eq.s32.totalorder %s25, 0
      %p81 = por %p79, %p80
      %p82 = scmp.ne.s32.totalorder %s68, %s69
      %p83 = scmp.eq.s32.totalorder %s26, 1
      %p84 = por %p82, %p83
      %p86 = scmp.ne.s32.totalorder %s69, %s85
      %p87 = scmp.eq.s32.totalorder %s26, 0
      %p88 = por %p86, %p87
      %s89 = ssub.s32 %s27, %s39
      %s90 = ssub.s32 %s28, %s35
      %s91 = sor.u32 %s89, %s90
      %p92 = scmp.eq.s32.totalorder %s91, 0
      %s94 = sadd.s32 %s93, 1
      %s95 = scalar_select %p92, %s93, %s94
      %p98 = pneg %p92
      %p99 = scmp.eq.s32.totalorder %s20, 1
      %p100 = por %p98, %p99
      %p101 = scmp.ne.s32.totalorder %s93, %s96
      %p102 = scmp.eq.s32.totalorder %s20, 0
      %p103 = por %p101, %p102
      %p104 = scmp.ne.s32.totalorder %s93, %s96
      %p105 = scmp.eq.s32.totalorder %s25, 1
      %p106 = por %p104, %p105
      %p107 = scmp.ne.s32.totalorder %s96, %s97
      %p108 = scmp.eq.s32.totalorder %s25, 0
      %p109 = por %p107, %p108
      %p110 = scmp.ne.s32.totalorder %s96, %s97
      %p111 = scmp.eq.s32.totalorder %s26, 1
      %p112 = por %p110, %p111
      %p114 = scmp.ne.s32.totalorder %s97, %s113
      %p115 = scmp.eq.s32.totalorder %s26, 0
      %p116 = por %p114, %p115
      %s118 = sadd.s32 %s117, 1
      %p121 = scmp.eq.s32.totalorder %s20, 1
      %p122 = scmp.ne.s32.totalorder %s117, %s119
      %p123 = scmp.eq.s32.totalorder %s20, 0
      %p124 = por %p122, %p123
      %p125 = scmp.ne.s32.totalorder %s117, %s119
      %p126 = scmp.eq.s32.totalorder %s25, 1
      %p127 = por %p125, %p126
      %p128 = scmp.ne.s32.totalorder %s119, %s120
      %p129 = scmp.eq.s32.totalorder %s25, 0
      %p130 = por %p128, %p129
      %p131 = scmp.ne.s32.totalorder %s119, %s120
      %p132 = scmp.eq.s32.totalorder %s26, 1
      %p133 = por %p131, %p132
      %p135 = scmp.ne.s32.totalorder %s120, %s134
      %p136 = scmp.eq.s32.totalorder %s26, 0
      %p137 = por %p135, %p136
      %s139 = sadd.s32 %s138, 1
      %p142 = scmp.eq.s32.totalorder %s20, 1
      %p143 = scmp.ne.s32.totalorder %s138, %s140
      %p144 = scmp.eq.s32.totalorder %s20, 0
      %p145 = por %p143, %p144
      %p146 = scmp.ne.s32.totalorder %s138, %s140
      %p147 = scmp.eq.s32.totalorder %s25, 1
      %p148 = por %p146, %p147
      %p149 = scmp.ne.s32.totalorder %s140, %s141
      %p150 = scmp.eq.s32.totalorder %s25, 0
      %p151 = por %p149, %p150
      %p152 = scmp.ne.s32.totalorder %s140, %s141
      %p153 = scmp.eq.s32.totalorder %s26, 1
      %p154 = por %p152, %p153
      %p156 = scmp.ne.s32.totalorder %s141, %s155
      %p157 = scmp.eq.s32.totalorder %s26, 0
      %p158 = por %p156, %p157
      %p159 = scmp.le.s32.totalorder 1, %s20
      %p160 = scmp.lt.s32.totalorder %s20, 3
      %p161 = pnand %p159, %p160
      %p162 = pneg %p161
      // Predicated region
      $region9: #{tpu_custom_call.1} parent=5 // pred_check
        _
      $region10: #{tpu_custom_call.1} parent=5 // pred_check_branch
        %164 = sbr.rel (%p161) target = $region12
      $region11: #{tpu_custom_call.1} parent=5 // pred_region
        %s165 = ssub.s32 %s20, 1
        // Predicated region
        $region13: #{tpu_custom_call.1} parent=11 // pred_check
          %p166 = pneg %p53
        $region14: #{tpu_custom_call.1} parent=11 // pred_check_branch
          %168 = sbr.rel (%p166) target = $region16
        $region15: #{tpu_custom_call.1} parent=11 // pred_region
          %170 = vsyncadd [#allocation7], 0
          %s172 = sshll.u32 %s0, 4
          %s173 = int_to_ptr.hbm [resolvable:$true] %s172
          %175 = dma.hbm_to_smem %s173, 16, [#allocation5], [#allocation7]
        $region16: #{tpu_custom_call.1} parent=11 // pred_fallthru
          _
      $region12: #{tpu_custom_call.1} parent=5 // pred_fallthru
        _
      %p176 = scmp.lt.s32.totalorder %s20, 2
      // Predicated region
      $region17: #{tpu_custom_call.1} parent=5 // pred_check
        %p177 = pneg %p176
      $region18: #{tpu_custom_call.1} parent=5 // pred_check_branch
        %179 = sbr.rel (%p177) target = $region20
      $region19: #{tpu_custom_call.1} parent=5 // pred_region
        // Predicated region
        $region21: #{tpu_custom_call.1} parent=19 // pred_check
          %p180 = pneg %p75
        $region22: #{tpu_custom_call.1} parent=19 // pred_check_branch
          %182 = sbr.rel (%p180) target = $region24
        $region23: #{tpu_custom_call.1} parent=19 // pred_region
          %s183 = sand.u32 %s65, 1
          %s184 = scalar_lea.sflag [#allocation6], %s183
          %s185 = sand.u32 %s65, 1
          %s186 = smul.addr %s185, 2
          %s187 = scalar_lea.vmem [#allocation9], %s186
          %189 = vsyncadd %s184, 0
          %s190 = sadd.s32 %s28, %s27
          %s191 = smul.addr %s190, 2
          %s192 = scalar_lea.hbm %s1, %s191
          %s194 = sshll.u32 %s192, 4
          %s195 = int_to_ptr.hbm [resolvable:$true] %s194
          %s196 = sshll.u32 %s187, 4
          %s197 = int_to_ptr.vmem [resolvable:$true] %s196
          %199 = dma.hbm_to_vmem [thread:$0]  %s195, 32, %s197, %s184
        $region24: #{tpu_custom_call.1} parent=19 // pred_fallthru
          _
        // Predicated region
        $region25: #{tpu_custom_call.1} parent=19 // pred_check
          %p200 = pneg %p103
        $region26: #{tpu_custom_call.1} parent=19 // pred_check_branch
          %202 = sbr.rel (%p200) target = $region28
        $region27: #{tpu_custom_call.1} parent=19 // pred_region
          %s203 = sand.u32 %s93, 1
          %s204 = scalar_lea.sflag [#allocation11], %s203
          %s205 = sand.u32 %s93, 1
          %s206 = smul.addr %s205, 8
          %s207 = scalar_lea.vmem [#allocation10], %s206
          %209 = vsyncadd %s204, 0
          %s210 = smul.addr %s27, 4
          %s211 = sadd.s32 %s28, %s210
          %s212 = smul.addr %s211, 2
          %s213 = scalar_lea.hbm %s2, %s212
          %s214 = sshll.u32 %s213, 4
          %s215 = int_to_ptr.hbm [resolvable:$true] %s214
          %s216 = sshll.u32 %s207, 4
          %s217 = int_to_ptr.vmem [resolvable:$true] %s216
          %222 = dma.hbm_to_vmem [thread:$0]  %s215, 128, %s217, %s204, 32, 32, 2
        $region28: #{tpu_custom_call.1} parent=19 // pred_fallthru
          _
      $region20: #{tpu_custom_call.1} parent=5 // pred_fallthru
        _
      %p223 = scmp.le.s32.totalorder 1, %s20
      %p224 = scmp.lt.s32.totalorder %s20, 3
      %p225 = pnand %p223, %p224
      %p226 = pneg %p225
      // Predicated region
      $region29: #{tpu_custom_call.1} parent=5 // pred_check
        _
      $region30: #{tpu_custom_call.1} parent=5 // pred_check_branch
        %228 = sbr.rel (%p225) target = $region32
      $region31: #{tpu_custom_call.1} parent=5 // pred_region
        %s229 = ssub.s32 %s20, 1
        // Predicated region
        $region33: #{tpu_custom_call.1} parent=31 // pred_check
          %p230 = pneg %p53
        $region34: #{tpu_custom_call.1} parent=31 // pred_check_branch
          %232 = sbr.rel (%p230) target = $region36
        $region35: #{tpu_custom_call.1} parent=31 // pred_region
          %234 = dma.done [#allocation7], 16
        $region36: #{tpu_custom_call.1} parent=31 // pred_fallthru
          _
        %s235 = sand.u32 %s68, 1
        %s236 = scalar_lea.sflag [#allocation6], %s235
        %s237 = sand.u32 %s68, 1
        %s238 = smul.addr %s237, 2
        %s239 = scalar_lea.vmem [#allocation9], %s238
        // Predicated region
        $region37: #{tpu_custom_call.1} parent=31 // pred_check
          %p240 = pneg %p81
        $region38: #{tpu_custom_call.1} parent=31 // pred_check_branch
          %242 = sbr.rel (%p240) target = $region40
        $region39: #{tpu_custom_call.1} parent=31 // pred_region
          %244 = dma.done %s236, 32
        $region40: #{tpu_custom_call.1} parent=31 // pred_fallthru
          _
        %s245 = sand.u32 %s96, 1
        %s246 = scalar_lea.sflag [#allocation11], %s245
        %s247 = sand.u32 %s96, 1
        %s248 = smul.addr %s247, 8
        %s249 = scalar_lea.vmem [#allocation10], %s248
        // Predicated region
        $region41: #{tpu_custom_call.1} parent=31 // pred_check
          %p250 = pneg %p109
        $region42: #{tpu_custom_call.1} parent=31 // pred_check_branch
          %252 = sbr.rel (%p250) target = $region44
        $region43: #{tpu_custom_call.1} parent=31 // pred_region
          %254 = dma.done %s246, 128
        $region44: #{tpu_custom_call.1} parent=31 // pred_fallthru
          _
        %255 = sfence
        %p256 = pneg %p53
        %p257 = pneg %p50
        %s258 = sand.u32 %s68, 1
        %s259 = scalar_lea.sflag [#allocation6], %s258
        %s260 = sand.u32 %s68, 1
        %s261 = smul.addr %s260, 2
        %s262 = scalar_lea.vmem [#allocation9], %s261
        %p263 = pneg %p81
        %p264 = pneg %p78
        %s265 = sand.u32 %s96, 1
        %s266 = scalar_lea.sflag [#allocation11], %s265
        %s267 = sand.u32 %s96, 1
        %s268 = smul.addr %s267, 8
        %s269 = scalar_lea.vmem [#allocation10], %s268
        %p270 = pneg %p109
        %p271 = pneg %p106
        %p272 = pneg %p130
        %p273 = pneg %p127
        %p274 = pneg %p151
        %p275 = pneg %p148
        %s276 = sadd.s32 %s29, %s30
        %p277 = scmp.eq.s32.totalorder %s276, 0
        // Predicated region
        $region45: #{tpu_custom_call.1} parent=31 // pred_check
          %p278 = pneg %p277
        $region46: #{tpu_custom_call.1} parent=31 // pred_check_branch
          %280 = sbr.rel (%p278) target = $region48
        $region47: #{tpu_custom_call.1} parent=31 // pred_region
          %281 = vst [vmem:[#allocation2] sm:$0xf] 0.0
          %282 = vst [vmem:[#allocation3] sm:$0xf] 0.0
          %283 = vst [vmem:[#allocation4] sm:$0xf] 0.0
        $region48: #{tpu_custom_call.1} parent=31 // pred_fallthru
          _
        %v284 = vld [vmem:[%s239] sm:$0x3]
        %v285 = vld [vmem:[%s249] sm:$0x3]
        %vm286 = vcmp.eq.s32.totalorder %v284, 0
        %v287 = vsel %vm286, 1, 0
        %v288 = vcvt.s32.f32 %v287
        %v289 = vld [vmem:[#allocation2] sm:$0x1]
        %v290 = vmul.f32 %v285, %v288
        %vm291 = vcmask 1041408
        %v292 = vsel %vm291, %v290, 0.0
        %v293 = vrot.slane %v292, 4
        %v294 = vadd.f32 %v292, %v293
        %v295 = vrot.slane %v294, 2
        %v296 = vadd.f32 %v294, %v295
        %v297 = vrot.slane %v296, 1
        %v298 = vadd.f32 %v296, %v297
        %v299 = vadd.f32 %v289, %v298
        %300 = vst [vmem:[#allocation2] sm:$0x1] %v299
        %v301 = vld [vmem:[#allocation3] sm:$0x1]
        %v302 = vmul.f32 %v285, %v285
        %v303 = vsel %vm291, %v302, 0.0
        %v304 = vrot.slane %v303, 4
        %v305 = vadd.f32 %v303, %v304
        %v306 = vrot.slane %v305, 2
        %v307 = vadd.f32 %v305, %v306
        %v308 = vrot.slane %v307, 1
        %v309 = vadd.f32 %v307, %v308
        %v310 = vadd.f32 %v301, %v309
        %311 = vst [vmem:[#allocation3] sm:$0x1] %v310
        %v312 = vld [vmem:[#allocation4] sm:$0x1]
        %v313 = vsel %vm291, %v288, 0.0
        %v314 = vrot.slane %v313, 4
        %v315 = vadd.f32 %v313, %v314
        %v316 = vrot.slane %v315, 2
        %v317 = vadd.f32 %v315, %v316
        %v318 = vrot.slane %v317, 1
        %v319 = vadd.f32 %v317, %v318
        %v320 = vadd.f32 %v312, %v319
        %321 = vst [vmem:[#allocation4] sm:$0x1] %v320
        %s322 = scalar_lea.vmem %s249, 2 [#allocation10]
        %v323 = vld [vmem:[%s322] sm:$0x3]
        %vm324 = vcmp.eq.s32.totalorder %v284, 1
        %v325 = vsel %vm324, 1, 0
        %v326 = vcvt.s32.f32 %v325
        %v327 = vld [vmem:[#allocation2 + $0x1] sm:$0x1]
        %v328 = vmul.f32 %v323, %v326
        %v329 = vsel %vm291, %v328, 0.0
        %v330 = vrot.slane %v329, 4
        %v331 = vadd.f32 %v329, %v330
        %v332 = vrot.slane %v331, 2
        %v333 = vadd.f32 %v331, %v332
        %v334 = vrot.slane %v333, 1
        %v335 = vadd.f32 %v333, %v334
        %v336 = vadd.f32 %v327, %v335
        %337 = vst [vmem:[#allocation2 + $0x1] sm:$0x1] %v336
        %v338 = vld [vmem:[#allocation3 + $0x1] sm:$0x1]
        %v339 = vmul.f32 %v323, %v323
        %v340 = vsel %vm291, %v339, 0.0
        %v341 = vrot.slane %v340, 4
        %v342 = vadd.f32 %v340, %v341
        %v343 = vrot.slane %v342, 2
        %v344 = vadd.f32 %v342, %v343
        %v345 = vrot.slane %v344, 1
        %v346 = vadd.f32 %v344, %v345
        %v347 = vadd.f32 %v338, %v346
        %348 = vst [vmem:[#allocation3 + $0x1] sm:$0x1] %v347
        %v349 = vld [vmem:[#allocation4 + $0x1] sm:$0x1]
        %v350 = vsel %vm291, %v326, 0.0
        %v351 = vrot.slane %v350, 4
        %v352 = vadd.f32 %v350, %v351
        %v353 = vrot.slane %v352, 2
        %v354 = vadd.f32 %v352, %v353
        %v355 = vrot.slane %v354, 1
        %v356 = vadd.f32 %v354, %v355
        %v357 = vadd.f32 %v349, %v356
        %358 = vst [vmem:[#allocation4 + $0x1] sm:$0x1] %v357
        %s359 = scalar_lea.vmem %s249, 4 [#allocation10]
        %v360 = vld [vmem:[%s359] sm:$0x3]
        %vm361 = vcmp.eq.s32.totalorder %v284, 2
        %v362 = vsel %vm361, 1, 0
        %v363 = vcvt.s32.f32 %v362
        %v364 = vld [vmem:[#allocation2 + $0x2] sm:$0x1]
        %v365 = vmul.f32 %v360, %v363
        %v366 = vsel %vm291, %v365, 0.0
        %v367 = vrot.slane %v366, 4
        %v368 = vadd.f32 %v366, %v367
        %v369 = vrot.slane %v368, 2
        %v370 = vadd.f32 %v368, %v369
        %v371 = vrot.slane %v370, 1
        %v372 = vadd.f32 %v370, %v371
        %v373 = vadd.f32 %v364, %v372
        %374 = vst [vmem:[#allocation2 + $0x2] sm:$0x1] %v373
        %v375 = vld [vmem:[#allocation3 + $0x2] sm:$0x1]
        %v376 = vmul.f32 %v360, %v360
        %v377 = vsel %vm291, %v376, 0.0
        %v378 = vrot.slane %v377, 4
        %v379 = vadd.f32 %v377, %v378
        %v380 = vrot.slane %v379, 2
        %v381 = vadd.f32 %v379, %v380
        %v382 = vrot.slane %v381, 1
        %v383 = vadd.f32 %v381, %v382
        %v384 = vadd.f32 %v375, %v383
        %385 = vst [vmem:[#allocation3 + $0x2] sm:$0x1] %v384
        %v386 = vld [vmem:[#allocation4 + $0x2] sm:$0x1]
        %v387 = vsel %vm291, %v363, 0.0
        %v388 = vrot.slane %v387, 4
        %v389 = vadd.f32 %v387, %v388
        %v390 = vrot.slane %v389, 2
        %v391 = vadd.f32 %v389, %v390
        %v392 = vrot.slane %v391, 1
        %v393 = vadd.f32 %v391, %v392
        %v394 = vadd.f32 %v386, %v393
        %395 = vst [vmem:[#allocation4 + $0x2] sm:$0x1] %v394
        %s396 = scalar_lea.vmem %s249, 6 [#allocation10]
        %v397 = vld [vmem:[%s396] sm:$0x3]
        %vm398 = vcmp.eq.s32.totalorder %v284, 3
        %v399 = vsel %vm398, 1, 0
        %v400 = vcvt.s32.f32 %v399
        %v401 = vld [vmem:[#allocation2 + $0x3] sm:$0x1]
        %v402 = vmul.f32 %v397, %v400
        %v403 = vsel %vm291, %v402, 0.0
        %v404 = vrot.slane %v403, 4
        %v405 = vadd.f32 %v403, %v404
        %v406 = vrot.slane %v405, 2
        %v407 = vadd.f32 %v405, %v406
        %v408 = vrot.slane %v407, 1
        %v409 = vadd.f32 %v407, %v408
        %v410 = vadd.f32 %v401, %v409
        %411 = vst [vmem:[#allocation2 + $0x3] sm:$0x1] %v410
        %v412 = vld [vmem:[#allocation3 + $0x3] sm:$0x1]
        %v413 = vmul.f32 %v397, %v397
        %v414 = vsel %vm291, %v413, 0.0
        %v415 = vrot.slane %v414, 4
        %v416 = vadd.f32 %v414, %v415
        %v417 = vrot.slane %v416, 2
        %v418 = vadd.f32 %v416, %v417
        %v419 = vrot.slane %v418, 1
        %v420 = vadd.f32 %v418, %v419
        %v421 = vadd.f32 %v412, %v420
        %422 = vst [vmem:[#allocation3 + $0x3] sm:$0x1] %v421
        %v423 = vld [vmem:[#allocation4 + $0x3] sm:$0x1]
        %v424 = vsel %vm291, %v400, 0.0
        %v425 = vrot.slane %v424, 4
        %v426 = vadd.f32 %v424, %v425
        %v427 = vrot.slane %v426, 2
        %v428 = vadd.f32 %v426, %v427
        %v429 = vrot.slane %v428, 1
        %v430 = vadd.f32 %v428, %v429
        %v431 = vadd.f32 %v423, %v430
        %432 = vst [vmem:[#allocation4 + $0x3] sm:$0x1] %v431
        %p433 = scmp.eq.s32.totalorder %s276, 1
        // Predicated region
        $region49: #{tpu_custom_call.1} parent=31 // pred_check
          %p434 = pneg %p433
        $region50: #{tpu_custom_call.1} parent=31 // pred_check_branch
          %436 = sbr.rel (%p434) target = $region52
        $region51: #{tpu_custom_call.1} parent=31 // pred_region
          %v437 = vld [vmem:[#allocation2] sm:$0x1]
          %vm438 = vcmask 1040384
          %v439 = vsel %vm438, %v437, 0.0
          %440 = vadd.xlane.f32.xlu0 %v439
          %v441 = vpop.xlane.xlu0 %440
          %v442 = vrot.slane %v441, 4
          %v443 = vadd.f32 %v441, %v442
          %v444 = vrot.slane %v443, 2
          %v445 = vadd.f32 %v443, %v444
          %v446 = vrot.slane %v445, 1
          %v447 = vadd.f32 %v445, %v446
          %s448 = vtos %v447
          %v449 = vld [vmem:[#allocation3] sm:$0x1]
          %v450 = vsel %vm438, %v449, 0.0
          %451 = vadd.xlane.f32.xlu0 %v450
          %v452 = vpop.xlane.xlu0 %451
          %v453 = vrot.slane %v452, 4
          %v454 = vadd.f32 %v452, %v453
          %v455 = vrot.slane %v454, 2
          %v456 = vadd.f32 %v454, %v455
          %v457 = vrot.slane %v456, 1
          %v458 = vadd.f32 %v456, %v457
          %s459 = vtos %v458
          %v460 = vld [vmem:[#allocation4] sm:$0x1]
          %v461 = vsel %vm438, %v460, 0.0
          %462 = vadd.xlane.f32.xlu0 %v461
          %v463 = vpop.xlane.xlu0 %462
          %v464 = vrot.slane %v463, 4
          %v465 = vadd.f32 %v463, %v464
          %v466 = vrot.slane %v465, 2
          %v467 = vadd.f32 %v465, %v466
          %v468 = vrot.slane %v467, 1
          %v469 = vadd.f32 %v467, %v468
          %s470 = vtos %v469
          %s471 = smul.f32 %s448, 2.0
          %s472 = sadd.f32 %s471, 1e-05
          %s473 = sadd.f32 %s459, %s470
          %s474 = sadd.f32 %s473, 1e-05
          %v475 = vstv %s474
          %v476 = vrcp.pop %v475
          %v477 = vmul.f32 %v475, %v476
          %v478 = vsub.f32 1.0, %v477
          %v479 = vmul.f32 %v476, %v478
          %v480 = vadd.f32 %v476, %v479
          %vm481 = vweird.f32 %v475
          %vm482 = vweird.f32 %v476
          %vm483 = vmor %vm481, %vm482
          %v484 = vsel %vm483, %v476, %v480
          %v485 = vand.u32 2147483647, %v475
          %vm486 = vcmp.eq.f32.partialorder %v485, 8.507059e+37
          %v487 = vand.u32 %v475, 2147483648
          %v488 = vor.u32 1.1754944e-38, %v487
          %v489 = vsel %vm486, %v488, %v484
          %s490 = vtos %v489
          %s491 = smul.f32 %s472, %s490
          %s492 = scalar_lea.smem [#allocation13], 0
          %493 = sst [smem:[%s492]] %s491
          %s494 = ssub.f32 1.0, %s491
          %s495 = sld [smem:[#allocation5]]
          %s496 = smul.f32 %s494, %s495
          %s497 = sadd.f32 %s496, 0.0
          %v498 = vld [vmem:[#allocation2 + $0x1] sm:$0x1]
          %v499 = vsel %vm438, %v498, 0.0
          %500 = vadd.xlane.f32.xlu0 %v499
          %v501 = vpop.xlane.xlu0 %500
          %v502 = vrot.slane %v501, 4
          %v503 = vadd.f32 %v501, %v502
          %v504 = vrot.slane %v503, 2
          %v505 = vadd.f32 %v503, %v504
          %v506 = vrot.slane %v505, 1
          %v507 = vadd.f32 %v505, %v506
          %s508 = vtos %v507
          %v509 = vld [vmem:[#allocation3 + $0x1] sm:$0x1]
          %v510 = vsel %vm438, %v509, 0.0
          %511 = vadd.xlane.f32.xlu0 %v510
          %v512 = vpop.xlane.xlu0 %511
          %v513 = vrot.slane %v512, 4
          %v514 = vadd.f32 %v512, %v513
          %v515 = vrot.slane %v514, 2
          %v516 = vadd.f32 %v514, %v515
          %v517 = vrot.slane %v516, 1
          %v518 = vadd.f32 %v516, %v517
          %s519 = vtos %v518
          %v520 = vld [vmem:[#allocation4 + $0x1] sm:$0x1]
          %v521 = vsel %vm438, %v520, 0.0
          %522 = vadd.xlane.f32.xlu0 %v521
          %v523 = vpop.xlane.xlu0 %522
          %v524 = vrot.slane %v523, 4
          %v525 = vadd.f32 %v523, %v524
          %v526 = vrot.slane %v525, 2
          %v527 = vadd.f32 %v525, %v526
          %v528 = vrot.slane %v527, 1
          %v529 = vadd.f32 %v527, %v528
          %s530 = vtos %v529
          %s531 = smul.f32 %s508, 2.0
          %s532 = sadd.f32 %s531, 1e-05
          %s533 = sadd.f32 %s519, %s530
          %s534 = sadd.f32 %s533, 1e-05
          %v535 = vstv %s534
          %v536 = vrcp.pop %v535
          %v537 = vmul.f32 %v535, %v536
          %v538 = vsub.f32 1.0, %v537
          %v539 = vmul.f32 %v536, %v538
          %v540 = vadd.f32 %v536, %v539
          %vm541 = vweird.f32 %v535
          %vm542 = vweird.f32 %v536
          %vm543 = vmor %vm541, %vm542
          %v544 = vsel %vm543, %v536, %v540
          %v545 = vand.u32 2147483647, %v535
          %vm546 = vcmp.eq.f32.partialorder %v545, 8.507059e+37
          %v547 = vand.u32 %v535, 2147483648
          %v548 = vor.u32 1.1754944e-38, %v547
          %v549 = vsel %vm546, %v548, %v544
          %s550 = vtos %v549
          %s551 = smul.f32 %s532, %s550
          %s552 = scalar_lea.smem [#allocation13], 1
          %553 = sst [smem:[%s552]] %s551
          %s554 = ssub.f32 1.0, %s551
          %s555 = sld [smem:[#allocation5 + $0x1]]
          %s556 = smul.f32 %s554, %s555
          %s557 = sadd.f32 %s497, %s556
          %v558 = vld [vmem:[#allocation2 + $0x2] sm:$0x1]
          %v559 = vsel %vm438, %v558, 0.0
          %560 = vadd.xlane.f32.xlu0 %v559
          %v561 = vpop.xlane.xlu0 %560
          %v562 = vrot.slane %v561, 4
          %v563 = vadd.f32 %v561, %v562
          %v564 = vrot.slane %v563, 2
          %v565 = vadd.f32 %v563, %v564
          %v566 = vrot.slane %v565, 1
          %v567 = vadd.f32 %v565, %v566
          %s568 = vtos %v567
          %v569 = vld [vmem:[#allocation3 + $0x2] sm:$0x1]
          %v570 = vsel %vm438, %v569, 0.0
          %571 = vadd.xlane.f32.xlu0 %v570
          %v572 = vpop.xlane.xlu0 %571
          %v573 = vrot.slane %v572, 4
          %v574 = vadd.f32 %v572, %v573
          %v575 = vrot.slane %v574, 2
          %v576 = vadd.f32 %v574, %v575
          %v577 = vrot.slane %v576, 1
          %v578 = vadd.f32 %v576, %v577
          %s579 = vtos %v578
          %v580 = vld [vmem:[#allocation4 + $0x2] sm:$0x1]
          %v581 = vsel %vm438, %v580, 0.0
          %582 = vadd.xlane.f32.xlu0 %v581
          %v583 = vpop.xlane.xlu0 %582
          %v584 = vrot.slane %v583, 4
          %v585 = vadd.f32 %v583, %v584
          %v586 = vrot.slane %v585, 2
          %v587 = vadd.f32 %v585, %v586
          %v588 = vrot.slane %v587, 1
          %v589 = vadd.f32 %v587, %v588
          %s590 = vtos %v589
          %s591 = smul.f32 %s568, 2.0
          %s592 = sadd.f32 %s591, 1e-05
          %s593 = sadd.f32 %s579, %s590
          %s594 = sadd.f32 %s593, 1e-05
          %v595 = vstv %s594
          %v596 = vrcp.pop %v595
          %v597 = vmul.f32 %v595, %v596
          %v598 = vsub.f32 1.0, %v597
          %v599 = vmul.f32 %v596, %v598
          %v600 = vadd.f32 %v596, %v599
          %vm601 = vweird.f32 %v595
          %vm602 = vweird.f32 %v596
          %vm603 = vmor %vm601, %vm602
          %v604 = vsel %vm603, %v596, %v600
          %v605 = vand.u32 2147483647, %v595
          %vm606 = vcmp.eq.f32.partialorder %v605, 8.507059e+37
          %v607 = vand.u32 %v595, 2147483648
          %v608 = vor.u32 1.1754944e-38, %v607
          %v609 = vsel %vm606, %v608, %v604
          %s610 = vtos %v609
          %s611 = smul.f32 %s592, %s610
          %s612 = scalar_lea.smem [#allocation13], 2
          %613 = sst [smem:[%s612]] %s611
          %s614 = ssub.f32 1.0, %s611
          %s615 = sld [smem:[#allocation5 + $0x2]]
          %s616 = smul.f32 %s614, %s615
          %s617 = sadd.f32 %s557, %s616
          %v618 = vld [vmem:[#allocation2 + $0x3] sm:$0x1]
          %v619 = vsel %vm438, %v618, 0.0
          %620 = vadd.xlane.f32.xlu0 %v619
          %v621 = vpop.xlane.xlu0 %620
          %v622 = vrot.slane %v621, 4
          %v623 = vadd.f32 %v621, %v622
          %v624 = vrot.slane %v623, 2
          %v625 = vadd.f32 %v623, %v624
          %v626 = vrot.slane %v625, 1
          %v627 = vadd.f32 %v625, %v626
          %s628 = vtos %v627
          %v629 = vld [vmem:[#allocation3 + $0x3] sm:$0x1]
          %v630 = vsel %vm438, %v629, 0.0
          %631 = vadd.xlane.f32.xlu0 %v630
          %v632 = vpop.xlane.xlu0 %631
          %v633 = vrot.slane %v632, 4
          %v634 = vadd.f32 %v632, %v633
          %v635 = vrot.slane %v634, 2
          %v636 = vadd.f32 %v634, %v635
          %v637 = vrot.slane %v636, 1
          %v638 = vadd.f32 %v636, %v637
          %s639 = vtos %v638
          %v640 = vld [vmem:[#allocation4 + $0x3] sm:$0x1]
          %v641 = vsel %vm438, %v640, 0.0
          %642 = vadd.xlane.f32.xlu0 %v641
          %v643 = vpop.xlane.xlu0 %642
          %v644 = vrot.slane %v643, 4
          %v645 = vadd.f32 %v643, %v644
          %v646 = vrot.slane %v645, 2
          %v647 = vadd.f32 %v645, %v646
          %v648 = vrot.slane %v647, 1
          %v649 = vadd.f32 %v647, %v648
          %s650 = vtos %v649
          %s651 = smul.f32 %s628, 2.0
          %s652 = sadd.f32 %s651, 1e-05
          %s653 = sadd.f32 %s639, %s650
          %s654 = sadd.f32 %s653, 1e-05
          %v655 = vstv %s654
          %v656 = vrcp.pop %v655
          %v657 = vmul.f32 %v655, %v656
          %v658 = vsub.f32 1.0, %v657
          %v659 = vmul.f32 %v656, %v658
          %v660 = vadd.f32 %v656, %v659
          %vm661 = vweird.f32 %v655
          %vm662 = vweird.f32 %v656
          %vm663 = vmor %vm661, %vm662
          %v664 = vsel %vm663, %v656, %v660
          %v665 = vand.u32 2147483647, %v655
          %vm666 = vcmp.eq.f32.partialorder %v665, 8.507059e+37
          %v667 = vand.u32 %v655, 2147483648
          %v668 = vor.u32 1.1754944e-38, %v667
          %v669 = vsel %vm666, %v668, %v664
          %s670 = vtos %v669
          %s671 = smul.f32 %s652, %s670
          %s672 = scalar_lea.smem [#allocation13], 3
          %673 = sst [smem:[%s672]] %s671
          %s674 = ssub.f32 1.0, %s671
          %s675 = sld [smem:[#allocation5 + $0x3]]
          %s676 = smul.f32 %s674, %s675
          %s677 = sadd.f32 %s617, %s676
          %v678 = vrcp.pop 4.0
          %v679 = vmul.f32 4.0, %v678
          %v680 = vsub.f32 1.0, %v679
          %v681 = vmul.f32 %v678, %v680
          %v682 = vadd.f32 %v678, %v681
          %vm683 = vweird.f32 %v678
          %v684 = vsel %vm683, %v678, %v682
          %s685 = vtos %v684
          %s686 = smul.f32 %s677, %s685
          %s687 = scalar_lea.smem [#allocation12], 0
          %688 = sst [smem:[%s687]] %s686
        $region52: #{tpu_custom_call.1} parent=31 // pred_fallthru
          _
        // Predicated region
        $region53: #{tpu_custom_call.1} parent=31 // pred_check
          %p689 = pneg %p127
        $region54: #{tpu_custom_call.1} parent=31 // pred_check_branch
          %691 = sbr.rel (%p689) target = $region56
        $region55: #{tpu_custom_call.1} parent=31 // pred_region
          %693 = vsyncadd [#allocation8], 0
          %s695 = sshll.u32 %s3, 4
          %s696 = int_to_ptr.hbm [resolvable:$true] %s695
          %698 = dma.smem_to_hbm [#allocation12], 16, %s696, [#allocation8]
        $region56: #{tpu_custom_call.1} parent=31 // pred_fallthru
          _
        // Predicated region
        $region57: #{tpu_custom_call.1} parent=31 // pred_check
          %p699 = pneg %p148
        $region58: #{tpu_custom_call.1} parent=31 // pred_check_branch
          %701 = sbr.rel (%p699) target = $region60
        $region59: #{tpu_custom_call.1} parent=31 // pred_region
          %703 = vsyncadd [#allocation14], 0
          %s705 = sshll.u32 %s4, 4
          %s706 = int_to_ptr.hbm [resolvable:$true] %s705
          %708 = dma.smem_to_hbm [#allocation13], 16, %s706, [#allocation14]
        $region60: #{tpu_custom_call.1} parent=31 // pred_fallthru
          _
        // Predicated region
        $region61: #{tpu_custom_call.1} parent=31 // pred_check
          %p709 = pneg %p127
        $region62: #{tpu_custom_call.1} parent=31 // pred_check_branch
          %711 = sbr.rel (%p709) target = $region64
        $region63: #{tpu_custom_call.1} parent=31 // pred_region
          %713 = dma.done [#allocation8], 16
        $region64: #{tpu_custom_call.1} parent=31 // pred_fallthru
          _
        // Predicated region
        $region65: #{tpu_custom_call.1} parent=31 // pred_check
          %p714 = pneg %p148
        $region66: #{tpu_custom_call.1} parent=31 // pred_check_branch
          %716 = sbr.rel (%p714) target = $region68
        $region67: #{tpu_custom_call.1} parent=31 // pred_region
          %718 = dma.done [#allocation14], 16
        $region68: #{tpu_custom_call.1} parent=31 // pred_fallthru
          _
        %719 = sfence
      $region32: #{tpu_custom_call.1} parent=5 // pred_fallthru
        _
      %p720 = scmp.le.s32.totalorder 2, %s20
      // Predicated region
      $region69: #{tpu_custom_call.1} parent=5 // pred_check
        %p721 = pneg %p720
      $region70: #{tpu_custom_call.1} parent=5 // pred_check_branch
        %723 = sbr.rel (%p721) target = $region72
      $region71: #{tpu_custom_call.1} parent=5 // pred_region
        %s724 = ssub.s32 %s20, 2
      $region72: #{tpu_custom_call.1} parent=5 // pred_fallthru
        _
    $region6: #{tpu_custom_call.1} parent=1 // loop_footer
      %s24 = sadd.s32 1, %s20
    $region7: #{tpu_custom_call.1} parent=1 // loop_footer_branch
      %19 = sbr.rel target = $region3
    $region8: #{tpu_custom_call.1} parent=1 // loop_exit
      _
    %725 = vsyncpa [#allocation6], 1
    %s726 = scalar_lea.sflag [#allocation6], 1
    %727 = vsyncpa %s726, 1
    %728 = vsyncpa [#allocation11], 1
    %s729 = scalar_lea.sflag [#allocation11], 1
    %730 = vsyncpa %s729, 1
    %731 = vsyncpa [#allocation7], 1
    %s732 = scalar_lea.sflag [#allocation7], 1
    %733 = vsyncpa %s732, 1
    %734 = vsyncpa [#allocation8], 1
    %s735 = scalar_lea.sflag [#allocation8], 1
    %736 = vsyncpa %s735, 1
    %737 = vsyncpa [#allocation14], 1

</llo_original>
